<compile_context>
chip_gen: v5e
topology: v5e:2x2
jax: 0.10.0
libtpu: 0.0.40
codegen_flags: <defaults>
</compile_context>

<pallas_src>
import functools

import jax
import jax.numpy as jnp
from jax import lax
from jax.experimental import pallas as pl
from jax.experimental.pallas import tpu as pltpu

LN_EPS = 1e-5  # PyTorch nn.LayerNorm default


def _conv_relu_ln(h, w_ft, b, gamma, beta, start_mask, end_mask):
    """Conv1d(K=3, padding=1) -> ReLU -> LayerNorm, channels-first (C, L).

    h:        (Cin, L) f32; L = seqs_per_block * T, sequences contiguous on lanes.
    w_ft:     (Cout, 3*Cin) im2col conv weight, w_ft[f, k*Cin + c] = w_torch[f, c, k].
    b/gamma/beta: (Cout, 1) columns.
    start_mask/end_mask: (1, L) bool, True at the first / last frame of each
              sequence (zeroes the rolled-in neighbour -> 'same' zero padding,
              and stops leakage across sequences packed on the lane axis).
    """
    L = h.shape[1]
    # Time-shifted copies via lane rotation (XLU slot) + boundary mask.
    h_prev = jnp.where(start_mask, 0.0, pltpu.roll(h, 1, axis=1))      # h[:, j-1]
    h_next = jnp.where(end_mask, 0.0, pltpu.roll(h, L - 1, axis=1))    # h[:, j+1]
    # im2col as a sublane stack (free vreg adjacency) -> one 3*Cin-deep matmul.
    cat = jnp.concatenate([h_prev, h, h_next], axis=0)                 # (3*Cin, L)
    y = jnp.dot(w_ft, cat, preferred_element_type=jnp.float32) + b     # (Cout, L)
    y = jnp.maximum(y, 0.0)                                            # ReLU
    # LayerNorm over channels, single pass: var = E[y^2] - mu^2 (sublane reduce).
    mu = jnp.mean(y, axis=0, keepdims=True)
    var = jnp.mean(y * y, axis=0, keepdims=True) - mu * mu
    return (y - mu) * lax.rsqrt(var + LN_EPS) * gamma + beta


def pitch_predictor_kernel(x_ref, w1_ref, w2_ref, pc_ref, wh_ref, out_ref, *,
                           seq_len):
    x = x_ref[0].astype(jnp.float32)                     # (D, L) channels-first
    L = x.shape[1]

    # Per-sequence boundary masks (sequences are contiguous lane chunks).
    col = lax.broadcasted_iota(jnp.int32, (1, L), 1)
    tpos = col if L == seq_len else lax.rem(col, seq_len)
    start_mask = tpos == 0
    end_mask = tpos == seq_len - 1

    pc = pc_ref[...]                                     # (F, 8) packed params
    h = _conv_relu_ln(x, w1_ref[...], pc[:, 0:1], pc[:, 1:2], pc[:, 2:3],
                      start_mask, end_mask)
    h = _conv_relu_ln(h, w2_ref[...], pc[:, 3:4], pc[:, 4:5], pc[:, 5:6],
                      start_mask, end_mask)

    # Fused heads [linear, mean, std]: (3, F) @ (F, L) -> (3, L), no transpose of h.
    head = jnp.dot(wh_ref[...], h, preferred_element_type=jnp.float32)
    head = head + pc[0:3, 6:7]                           # head biases
    out_ref[...] = head[None]                            # (1, 3, L) lane-dense store


def pitch_predictor(x, w1_ft, b1, g1, be1, w2_ft, b2, g2, be2, wh, bh, *,
                    seqs_per_block=None):
    """Forward pass of PitchPredictor (eval mode; Dropout = identity).

    Returns (out, mean, std): out (1, B, T) (torch .squeeze() + eval .unsqueeze(0)),
    mean/std (B, 1).
    """
    B, T, D = x.shape
    F = w1_ft.shape[0]

    # >=2 grid steps feeds both v7x TensorCores; folding sequences onto lanes
    # amortises per-step overhead on single-TC v5e/v6e (use seqs_per_block=B there).
    if seqs_per_block is None:
        seqs_per_block = B // 2 if (B >= 2 and B % 2 == 0) else 1
    bb = seqs_per_block
    assert B % bb == 0, "seqs_per_block must divide the batch"
    nb = B // bb
    L = bb * T

    # Channels-first, `bb` sequences contiguous along the lane (time) axis.
    x_cf = jnp.transpose(x, (0, 2, 1)).reshape(nb, bb, D, T)
    x_cf = jnp.transpose(x_cf, (0, 2, 1, 3)).reshape(nb, D, L)

    # Pack small per-channel params into one (F, 8) column slab:
    # cols 0-5 = b1, g1, be1, b2, g2, be2; col 6 rows 0-2 = head biases.
    pcols = jnp.zeros((F, 8), jnp.float32)
    pcols = pcols.at[:, 0].set(b1).at[:, 1].set(g1).at[:, 2].set(be1)
    pcols = pcols.at[:, 3].set(b2).at[:, 4].set(g2).at[:, 5].set(be2)
    pcols = pcols.at[0:3, 6].set(bh)

    # VMEM budget from the actual footprint (double-buffered I/O blocks +
    # resident weights + f32 intermediates + headroom), not a flat 32 MiB.
    blk_bytes = 4 * (D * L + 3 * L)
    w_bytes = 4 * (w1_ft.size + w2_ft.size + pcols.size + wh.size)
    interm_bytes = 4 * L * (3 * max(D, F) + 4 * F)
    vmem_limit = int(2 * (blk_bytes + w_bytes) + interm_bytes + (4 << 20))

    kernel = functools.partial(pitch_predictor_kernel, seq_len=T)
    head = pl.pallas_call(
        kernel,
        out_shape=jax.ShapeDtypeStruct((nb, 3, L), jnp.float32),
        grid=(nb,),
        in_specs=[
            pl.BlockSpec((1, D, L), lambda b: (b, 0, 0)),
            pl.BlockSpec(w1_ft.shape, lambda b: (0, 0)),
            pl.BlockSpec(w2_ft.shape, lambda b: (0, 0)),
            pl.BlockSpec(pcols.shape, lambda b: (0, 0)),
            pl.BlockSpec(wh.shape, lambda b: (0, 0)),
        ],
        out_specs=pl.BlockSpec((1, 3, L), lambda b: (b, 0, 0)),
        compiler_params=pltpu.CompilerParams(
            dimension_semantics=("parallel",),
            vmem_limit_bytes=vmem_limit),
    )(x_cf, w1_ft, w2_ft, pcols, wh)
    # TODO(synk): for very large T, additionally tile the time axis (1-frame conv
    # halo; re-derive the tile size against v7x's 64 MiB VMEM).

    head = head.reshape(nb, 3, bb, T).transpose(0, 2, 1, 3).reshape(B, 3, T)
    out_bt = head[:, 0, :]                                   # linear head, (B, T)
    # mean/std heads are linear -> Linear(h.mean(time)) == mean_t(Linear(h));
    # the module's .mean(1) is over all T frames (no padding mask in the spec).
    mean = jnp.mean(head[:, 1, :], axis=-1, keepdims=True)   # (B, 1)
    std = jnp.mean(head[:, 2, :], axis=-1, keepdims=True)    # (B, 1)

    # torch: out = linear(...).squeeze();  eval (not training) -> unsqueeze(0).
    out = jnp.expand_dims(jnp.squeeze(out_bt[..., None]), 0)
    return out, mean, std


def _reference(x, w1_ft, b1, g1, be1, w2_ft, b2, g2, be2, wh, bh):
    """Pure-JAX reference, same parameter layout (exact-f32 einsums)."""
    hp = lax.Precision.HIGHEST

    def block(h, wf, b, g, be):
        zero = jnp.zeros_like(h[:, :1, :])
        prev = jnp.concatenate([zero, h[:, :-1]], axis=1)
        nxt = jnp.concatenate([h[:, 1:], zero], axis=1)
        cat = jnp.concatenate([prev, h, nxt], axis=-1)          # (B, T, 3*Cin)
        y = jnp.einsum('btk,fk->btf', cat, wf, precision=hp) + b[None, None, :]
        y = jnp.maximum(y, 0.0)
        mu = y.mean(-1, keepdims=True)
        var = ((y - mu) ** 2).mean(-1, keepdims=True)
        return (y - mu) / jnp.sqrt(var + LN_EPS) * g[None, None, :] + be[None, None, :]

    h = block(x, w1_ft, b1, g1, be1)
    h = block(h, w2_ft, b2, g2, be2)
    head = jnp.einsum('btf,of->bot', h, wh, precision=hp) + bh[None, :, None]
    out = jnp.expand_dims(jnp.squeeze(head[:, 0, :][..., None]), 0)
    mean = head[:, 1, :].mean(-1, keepdims=True)
    std = head[:, 2, :].mean(-1, keepdims=True)
    return out, mean, std


if __name__ == "__main__":
    # encoder_dim=32, pitch_predictor_filter_size=32, kernel_size=3, dropout=eval-identity
    B, T, D, F, K = 2, 128, 32, 32, 3
    ks = jax.random.split(jax.random.PRNGKey(0), 10)

    x = jax.random.normal(ks[0], (B, T, D), jnp.float32)

    # Conv1d #1: torch weight (F, D, K) -> transpose(0, 2, 1).reshape(F, K*D)
    w1 = jax.random.normal(ks[1], (F, K * D), jnp.float32) * 0.1
    b1 = jax.random.normal(ks[2], (F,), jnp.float32) * 0.01
    g1 = jnp.ones((F,), jnp.float32) + 0.05 * jax.random.normal(ks[3], (F,), jnp.float32)
    be1 = 0.01 * jax.random.normal(ks[4], (F,), jnp.float32)

    # Conv1d #2: (F, K*F)
    w2 = jax.random.normal(ks[5], (F, K * F), jnp.float32) * 0.1
    b2 = jax.random.normal(ks[6], (F,), jnp.float32) * 0.01
    g2 = jnp.ones((F,), jnp.float32)
    be2 = jnp.zeros((F,), jnp.float32)

    # Fused heads: rows = [linear_layer.w, mean_pred.w, std_pred.w]; biases (3,)
    wh = jax.random.normal(ks[7], (3, F), jnp.float32) * 0.1
    bh = jax.random.normal(ks[8], (3,), jnp.float32) * 0.01

    args = (x, w1, b1, g1, be1, w2, b2, g2, be2, wh, bh)
    out, mean, std = pitch_predictor(*args)
    jax.block_until_ready((out, mean, std))
    assert out.shape == (1, B, T) and mean.shape == (B, 1) and std.shape == (B, 1)

    # Numerical sanity vs pure-JAX reference (all-f32 path -> tight tolerance).
    r_out, r_mean, r_std = _reference(*args)
    assert jnp.allclose(out, r_out, atol=1e-4, rtol=1e-4), float(jnp.max(jnp.abs(out - r_out)))
    assert jnp.allclose(mean, r_mean, atol=1e-4, rtol=1e-4)
    assert jnp.allclose(std, r_std, atol=1e-4, rtol=1e-4)

    print("KERNEL_OK")
</pallas_src>

<mosaic_0001>
module attributes {stable_mosaic.version = 11 : i64} {
  func.func @pitch_predictor_kernel(%arg0: i32, %arg1: memref<1x32x128xf32, #tpu.memory_space<vmem>>, %arg2: memref<32x96xf32, #tpu.memory_space<vmem>>, %arg3: memref<32x96xf32, #tpu.memory_space<vmem>>, %arg4: memref<32x8xf32, #tpu.memory_space<vmem>>, %arg5: memref<3x32xf32, #tpu.memory_space<vmem>>, %arg6: memref<1x3x128xf32, #tpu.memory_space<vmem>>) attributes {dimension_semantics = [#tpu.dimension_semantics<parallel>], iteration_bounds = array<i64: 2>, scalar_prefetch = 0 : i64, scratch_operands = 0 : i64, tpu.core_type = #tpu.core_type<tc>, window_params = [{transform_indices = @transform_0, window_bounds = array<i64: 1, 32, 128>}, {pipeline_mode = #tpu.pipeline_mode<synchronous>, transform_indices = @transform_1, window_bounds = array<i64: 32, 96>}, {pipeline_mode = #tpu.pipeline_mode<synchronous>, transform_indices = @transform_2, window_bounds = array<i64: 32, 96>}, {pipeline_mode = #tpu.pipeline_mode<synchronous>, transform_indices = @transform_3, window_bounds = array<i64: 32, 8>}, {pipeline_mode = #tpu.pipeline_mode<synchronous>, transform_indices = @transform_4, window_bounds = array<i64: 3, 32>}, {transform_indices = @transform_5, window_bounds = array<i64: 1, 3, 128>}]} {
    %c0 = arith.constant 0 : index
    %c0_0 = arith.constant 0 : index
    %c0_1 = arith.constant 0 : index
    %0 = vector.load %arg1[%c0, %c0_0, %c0_1] : memref<1x32x128xf32, #tpu.memory_space<vmem>>, vector<1x32x128xf32>
    %1 = vector.shape_cast %0 : vector<1x32x128xf32> to vector<32x128xf32>
    %2 = tpu.iota {dimensions = array<i32: 1>} : vector<1x128xi32>
    %c0_i32 = arith.constant 0 : i32
    %3 = vector.broadcast %c0_i32 : i32 to vector<1x128xi32>
    %4 = arith.cmpi eq, %2, %3 : vector<1x128xi32>
    %c127_i32 = arith.constant 127 : i32
    %5 = vector.broadcast %c127_i32 : i32 to vector<1x128xi32>
    %6 = arith.cmpi eq, %2, %5 : vector<1x128xi32>
    %c0_2 = arith.constant 0 : index
    %c0_3 = arith.constant 0 : index
    %7 = vector.load %arg4[%c0_2, %c0_3] : memref<32x8xf32, #tpu.memory_space<vmem>>, vector<32x8xf32>
    %c0_4 = arith.constant 0 : index
    %c0_5 = arith.constant 0 : index
    %8 = vector.load %arg2[%c0_4, %c0_5] : memref<32x96xf32, #tpu.memory_space<vmem>>, vector<32x96xf32>
    %9 = vector.extract_strided_slice %7 {offsets = [0, 0], sizes = [32, 1], strides = [1, 1]} : vector<32x8xf32> to vector<32x1xf32>
    %10 = vector.extract_strided_slice %7 {offsets = [0, 1], sizes = [32, 1], strides = [1, 1]} : vector<32x8xf32> to vector<32x1xf32>
    %11 = vector.extract_strided_slice %7 {offsets = [0, 2], sizes = [32, 1], strides = [1, 1]} : vector<32x8xf32> to vector<32x1xf32>
    %c1_i32 = arith.constant 1 : i32
    %12 = tpu.dynamic_rotate %1 by %c1_i32 dim 1 : vector<32x128xf32>, i32 -> vector<32x128xf32>
    %cst = arith.constant 0.000000e+00 : f32
    %13 = vector.shape_cast %4 : vector<1x128xi1> to vector<1x128xi1>
    %14 = vector.broadcast %13 : vector<1x128xi1> to vector<32x128xi1>
    %15 = vector.broadcast %cst : f32 to vector<32x128xf32>
    %16 = arith.select %14, %15, %12 : vector<32x128xi1>, vector<32x128xf32>
    %c127_i32_6 = arith.constant 127 : i32
    %17 = tpu.dynamic_rotate %1 by %c127_i32_6 dim 1 : vector<32x128xf32>, i32 -> vector<32x128xf32>
    %cst_7 = arith.constant 0.000000e+00 : f32
    %18 = vector.shape_cast %6 : vector<1x128xi1> to vector<1x128xi1>
    %19 = vector.broadcast %18 : vector<1x128xi1> to vector<32x128xi1>
    %20 = vector.broadcast %cst_7 : f32 to vector<32x128xf32>
    %21 = arith.select %19, %20, %17 : vector<32x128xi1>, vector<32x128xf32>
    %22 = tpu.concatenate %16, %1, %21 in 0 : vector<32x128xf32>, vector<32x128xf32>, vector<32x128xf32> -> vector<96x128xf32>
    %cst_8 = arith.constant dense<0.000000e+00> : vector<32x128xf32>
    %23 = tpu.matmul %8, %22, %cst_8 {dimension_numbers = #tpu.dot_dimension_numbers<[1], [0], [0], [1], [0, 0, 1, 1], [], []>} : vector<32x96xf32>, vector<96x128xf32>, vector<32x128xf32> -> vector<32x128xf32>
    %24 = vector.broadcast %9 : vector<32x1xf32> to vector<32x128xf32>
    %25 = arith.addf %23, %24 : vector<32x128xf32>
    %cst_9 = arith.constant 0.000000e+00 : f32
    %26 = vector.broadcast %cst_9 : f32 to vector<32x128xf32>
    %27 = arith.maximumf %25, %26 : vector<32x128xf32>
    %cst_10 = arith.constant dense<0.000000e+00> : vector<128xf32>
    %28 = vector.multi_reduction <add>, %27, %cst_10 [0] : vector<32x128xf32> to vector<128xf32>
    %29 = vector.shape_cast %28 : vector<128xf32> to vector<1x128xf32>
    %cst_11 = arith.constant 3.200000e+01 : f32
    %30 = vector.broadcast %cst_11 : f32 to vector<1x128xf32>
    %31 = arith.divf %29, %30 : vector<1x128xf32>
    %32 = arith.mulf %27, %27 : vector<32x128xf32>
    %cst_12 = arith.constant dense<0.000000e+00> : vector<128xf32>
    %33 = vector.multi_reduction <add>, %32, %cst_12 [0] : vector<32x128xf32> to vector<128xf32>
    %34 = vector.shape_cast %33 : vector<128xf32> to vector<1x128xf32>
    %cst_13 = arith.constant 3.200000e+01 : f32
    %35 = vector.broadcast %cst_13 : f32 to vector<1x128xf32>
    %36 = arith.divf %34, %35 : vector<1x128xf32>
    %37 = arith.mulf %31, %31 : vector<1x128xf32>
    %38 = arith.subf %36, %37 : vector<1x128xf32>
    %39 = vector.broadcast %31 : vector<1x128xf32> to vector<32x128xf32>
    %40 = arith.subf %27, %39 : vector<32x128xf32>
    %cst_14 = arith.constant 9.99999974E-6 : f32
    %41 = vector.broadcast %cst_14 : f32 to vector<1x128xf32>
    %42 = arith.addf %38, %41 : vector<1x128xf32>
    %43 = math.rsqrt %42 : vector<1x128xf32>
    %44 = vector.broadcast %43 : vector<1x128xf32> to vector<32x128xf32>
    %45 = arith.mulf %40, %44 : vector<32x128xf32>
    %46 = vector.broadcast %10 : vector<32x1xf32> to vector<32x128xf32>
    %47 = arith.mulf %45, %46 : vector<32x128xf32>
    %48 = vector.broadcast %11 : vector<32x1xf32> to vector<32x128xf32>
    %49 = arith.addf %47, %48 : vector<32x128xf32>
    %c0_15 = arith.constant 0 : index
    %c0_16 = arith.constant 0 : index
    %50 = vector.load %arg3[%c0_15, %c0_16] : memref<32x96xf32, #tpu.memory_space<vmem>>, vector<32x96xf32>
    %51 = vector.extract_strided_slice %7 {offsets = [0, 3], sizes = [32, 1], strides = [1, 1]} : vector<32x8xf32> to vector<32x1xf32>
    %52 = vector.extract_strided_slice %7 {offsets = [0, 4], sizes = [32, 1], strides = [1, 1]} : vector<32x8xf32> to vector<32x1xf32>
    %53 = vector.extract_strided_slice %7 {offsets = [0, 5], sizes = [32, 1], strides = [1, 1]} : vector<32x8xf32> to vector<32x1xf32>
    %c1_i32_17 = arith.constant 1 : i32
    %54 = tpu.dynamic_rotate %49 by %c1_i32_17 dim 1 : vector<32x128xf32>, i32 -> vector<32x128xf32>
    %cst_18 = arith.constant 0.000000e+00 : f32
    %55 = vector.shape_cast %4 : vector<1x128xi1> to vector<1x128xi1>
    %56 = vector.broadcast %55 : vector<1x128xi1> to vector<32x128xi1>
    %57 = vector.broadcast %cst_18 : f32 to vector<32x128xf32>
    %58 = arith.select %56, %57, %54 : vector<32x128xi1>, vector<32x128xf32>
    %c127_i32_19 = arith.constant 127 : i32
    %59 = tpu.dynamic_rotate %49 by %c127_i32_19 dim 1 : vector<32x128xf32>, i32 -> vector<32x128xf32>
    %cst_20 = arith.constant 0.000000e+00 : f32
    %60 = vector.shape_cast %6 : vector<1x128xi1> to vector<1x128xi1>
    %61 = vector.broadcast %60 : vector<1x128xi1> to vector<32x128xi1>
    %62 = vector.broadcast %cst_20 : f32 to vector<32x128xf32>
    %63 = arith.select %61, %62, %59 : vector<32x128xi1>, vector<32x128xf32>
    %64 = tpu.concatenate %58, %49, %63 in 0 : vector<32x128xf32>, vector<32x128xf32>, vector<32x128xf32> -> vector<96x128xf32>
    %cst_21 = arith.constant dense<0.000000e+00> : vector<32x128xf32>
    %65 = tpu.matmul %50, %64, %cst_21 {dimension_numbers = #tpu.dot_dimension_numbers<[1], [0], [0], [1], [0, 0, 1, 1], [], []>} : vector<32x96xf32>, vector<96x128xf32>, vector<32x128xf32> -> vector<32x128xf32>
    %66 = vector.broadcast %51 : vector<32x1xf32> to vector<32x128xf32>
    %67 = arith.addf %65, %66 : vector<32x128xf32>
    %cst_22 = arith.constant 0.000000e+00 : f32
    %68 = vector.broadcast %cst_22 : f32 to vector<32x128xf32>
    %69 = arith.maximumf %67, %68 : vector<32x128xf32>
    %cst_23 = arith.constant dense<0.000000e+00> : vector<128xf32>
    %70 = vector.multi_reduction <add>, %69, %cst_23 [0] : vector<32x128xf32> to vector<128xf32>
    %71 = vector.shape_cast %70 : vector<128xf32> to vector<1x128xf32>
    %cst_24 = arith.constant 3.200000e+01 : f32
    %72 = vector.broadcast %cst_24 : f32 to vector<1x128xf32>
    %73 = arith.divf %71, %72 : vector<1x128xf32>
    %74 = arith.mulf %69, %69 : vector<32x128xf32>
    %cst_25 = arith.constant dense<0.000000e+00> : vector<128xf32>
    %75 = vector.multi_reduction <add>, %74, %cst_25 [0] : vector<32x128xf32> to vector<128xf32>
    %76 = vector.shape_cast %75 : vector<128xf32> to vector<1x128xf32>
    %cst_26 = arith.constant 3.200000e+01 : f32
    %77 = vector.broadcast %cst_26 : f32 to vector<1x128xf32>
    %78 = arith.divf %76, %77 : vector<1x128xf32>
    %79 = arith.mulf %73, %73 : vector<1x128xf32>
    %80 = arith.subf %78, %79 : vector<1x128xf32>
    %81 = vector.broadcast %73 : vector<1x128xf32> to vector<32x128xf32>
    %82 = arith.subf %69, %81 : vector<32x128xf32>
    %cst_27 = arith.constant 9.99999974E-6 : f32
    %83 = vector.broadcast %cst_27 : f32 to vector<1x128xf32>
    %84 = arith.addf %80, %83 : vector<1x128xf32>
    %85 = math.rsqrt %84 : vector<1x128xf32>
    %86 = vector.broadcast %85 : vector<1x128xf32> to vector<32x128xf32>
    %87 = arith.mulf %82, %86 : vector<32x128xf32>
    %88 = vector.broadcast %52 : vector<32x1xf32> to vector<32x128xf32>
    %89 = arith.mulf %87, %88 : vector<32x128xf32>
    %90 = vector.broadcast %53 : vector<32x1xf32> to vector<32x128xf32>
    %91 = arith.addf %89, %90 : vector<32x128xf32>
    %c0_28 = arith.constant 0 : index
    %c0_29 = arith.constant 0 : index
    %92 = vector.load %arg5[%c0_28, %c0_29] : memref<3x32xf32, #tpu.memory_space<vmem>>, vector<3x32xf32>
    %cst_30 = arith.constant dense<0.000000e+00> : vector<3x128xf32>
    %93 = tpu.matmul %92, %91, %cst_30 {dimension_numbers = #tpu.dot_dimension_numbers<[1], [0], [0], [1], [0, 0, 1, 1], [], []>} : vector<3x32xf32>, vector<32x128xf32>, vector<3x128xf32> -> vector<3x128xf32>
    %94 = vector.extract_strided_slice %7 {offsets = [0, 6], sizes = [3, 1], strides = [1, 1]} : vector<32x8xf32> to vector<3x1xf32>
    %95 = vector.broadcast %94 : vector<3x1xf32> to vector<3x128xf32>
    %96 = arith.addf %93, %95 : vector<3x128xf32>
    %97 = vector.shape_cast %96 : vector<3x128xf32> to vector<1x3x128xf32>
    %c0_31 = arith.constant 0 : index
    %c0_32 = arith.constant 0 : index
    %c0_33 = arith.constant 0 : index
    %98 = vector.load %arg6[%c0_31, %c0_32, %c0_33] : memref<1x3x128xf32, #tpu.memory_space<vmem>>, vector<1x3x128xf32>
    tpu.vector_store %arg6[%c0_31, %c0_32, %c0_33], %97 {strides = array<i32>} : memref<1x3x128xf32, #tpu.memory_space<vmem>>, vector<1x3x128xf32>,
    return
  }
  func.func @transform_0(%arg0: i32) -> (i32, i32, i32) {
    %c0_i32 = arith.constant 0 : i32
    %c0_i32_0 = arith.constant 0 : i32
    %c0_i32_1 = arith.constant 0 : i32
    return %arg0, %c0_i32, %c0_i32_0 : i32, i32, i32
  }
  func.func @transform_1(%arg0: i32) -> (i32, i32) {
    %c0_i32 = arith.constant 0 : i32
    %c0_i32_0 = arith.constant 0 : i32
    %c0_i32_1 = arith.constant 0 : i32
    return %c0_i32, %c0_i32_0 : i32, i32
  }
  func.func @transform_2(%arg0: i32) -> (i32, i32) {
    %c0_i32 = arith.constant 0 : i32
    %c0_i32_0 = arith.constant 0 : i32
    %c0_i32_1 = arith.constant 0 : i32
    return %c0_i32, %c0_i32_0 : i32, i32
  }
  func.func @transform_3(%arg0: i32) -> (i32, i32) {
    %c0_i32 = arith.constant 0 : i32
    %c0_i32_0 = arith.constant 0 : i32
    %c0_i32_1 = arith.constant 0 : i32
    return %c0_i32, %c0_i32_0 : i32, i32
  }
  func.func @transform_4(%arg0: i32) -> (i32, i32) {
    %c0_i32 = arith.constant 0 : i32
    %c0_i32_0 = arith.constant 0 : i32
    %c0_i32_1 = arith.constant 0 : i32
    return %c0_i32, %c0_i32_0 : i32, i32
  }
  func.func @transform_5(%arg0: i32) -> (i32, i32, i32) {
    %c0_i32 = arith.constant 0 : i32
    %c0_i32_0 = arith.constant 0 : i32
    %c0_i32_1 = arith.constant 0 : i32
    return %arg0, %c0_i32, %c0_i32_0 : i32, i32, i32
  }
}

</mosaic_0001>

<llo_original>
// kernel: tpu_custom_call.1
$region0: #{tpu_custom_call.1}
  #allocation0 [shape = 'u32[]', space=smem, size = 0x4, offset = 0x4, fixed_abs, tag = 'smem constant byte address 0x4 - core index']
  #allocation1 [shape = 'u32[72,128]{1,0:T(1,128)}', space=vmem, size = 0x9000, scoped, tag = 'internal scratch']
  %s0 = inlined_call_operand.hbm [shape: f32[2,32,128], index: 0, kind: input, shape index: {}]
  %s1 = inlined_call_operand.vmem [shape: f32[32,96], index: 1, kind: input, shape index: {}]
  %s2 = inlined_call_operand.hbm [shape: f32[32,96], index: 2, kind: input, shape index: {}]
  %s3 = inlined_call_operand.vmem [shape: f32[32,8], index: 3, kind: input, shape index: {}]
  %s4 = inlined_call_operand.vmem [shape: f32[3,32], index: 4, kind: input, shape index: {}]
  %s5 = inlined_call_operand.vmem [shape: f32[2,3,128], index: 5, kind: output, shape index: {}]
  %s6 = sld [smem:[#allocation0]]
  $region61: #{tpu_custom_call.1} parent=0
    _
  %s8 = ssub.s32 1, %s6
  %s9 = scalar_select 0, %s8, %s6
  $region1: #{tpu_custom_call.1} parent=0
    #allocation2 [shape = 'u8[32768]{0}', space=vmem, size = 0x8000, scoped, tag = 'input window, operand 0']
    #allocation3 [shape = 's32[2]{0}', space=sflag, size = 0x8, scoped, tag = 'scoped memory for tpu_custom_call.1']
    #allocation4 [shape = 'u8[16384]{0}', space=vmem, size = 0x4000, scoped, tag = 'input window, operand 2, single buffered']
    #allocation5 [shape = 's32[1]{0}', space=sflag, size = 0x4, scoped, tag = 'scoped memory for tpu_custom_call.1']
    %10 = vsyncpa [#allocation3], 0
    %s11 = scalar_lea.sflag [#allocation3], 1
    %12 = vsyncpa %s11, 0
    %13 = vsyncpa [#allocation5], 0
    loop: start=0, step=1, limit=4
    $region2: #{tpu_custom_call.1} parent=1 // loop_pre_header
      _
    $region3: #{tpu_custom_call.1} parent=1 // loop_header
      %s15 = sphi 0, %s19
      %p16 = scmp.ge.s32.totalorder %s15, 4
      %s25 = sphi 0, %s27
      %s28 = sphi 0, %s25
      %s29 = sphi 0, %s28
      %s45 = sphi 0, %s29
      %s49 = sphi 0, %s49
      %s51 = sphi 0, %s49
      %s52 = sphi 0, %s51
      %s66 = sphi 0, %s52
      %s70 = sphi 0, %s70
      %s72 = sphi 0, %s70
      %s73 = sphi 0, %s72
      %s87 = sphi 0, %s73
      %s91 = sphi 0, %s91
      %s93 = sphi 0, %s91
      %s94 = sphi 0, %s93
      %s108 = sphi 0, %s94
      %s112 = sphi 0, %s112
      %s114 = sphi 0, %s112
      %s115 = sphi 0, %s114
      %s129 = sphi 0, %s115
      %s135 = sphi 0, %s137
      %s138 = sphi 0, %s135
      %s139 = sphi 0, %s138
      %s155 = sphi 0, %s139
    $region4: #{tpu_custom_call.1} parent=1 // loop_header_branch
      %18 = sbr.rel (%p16) target = $region8
    $region5: #{tpu_custom_call.1} parent=1 // loop_body
      %s20 = ssub.s32 %s15, 1
      %s21 = ssub.s32 %s15, 2
      %s22 = sadd.s32 %s15, 1
      %s23 = ssub.s32 %s15, %s22
      %p24 = scmp.eq.s32.totalorder %s23, 0
      %s26 = sadd.s32 %s25, 1
      %s27 = scalar_select %p24, %s25, %s26
      %p30 = pneg %p24
      %p31 = scmp.eq.s32.totalorder %s15, 1
      %p32 = por %p30, %p31
      %p33 = scmp.ne.s32.totalorder %s25, %s28
      %p34 = scmp.eq.s32.totalorder %s15, 0
      %p35 = por %p33, %p34
      %p36 = scmp.ne.s32.totalorder %s25, %s28
      %p37 = scmp.eq.s32.totalorder %s20, 1
      %p38 = por %p36, %p37
      %p39 = scmp.ne.s32.totalorder %s28, %s29
      %p40 = scmp.eq.s32.totalorder %s20, 0
      %p41 = por %p39, %p40
      %p42 = scmp.ne.s32.totalorder %s28, %s29
      %p43 = scmp.eq.s32.totalorder %s21, 1
      %p44 = por %p42, %p43
      %p46 = scmp.ne.s32.totalorder %s29, %s45
      %p47 = scmp.eq.s32.totalorder %s21, 0
      %p48 = por %p46, %p47
      %s50 = sadd.s32 %s49, 1
      %p53 = scmp.eq.s32.totalorder %s15, 1
      %p54 = scmp.ne.s32.totalorder %s49, %s51
      %p55 = scmp.eq.s32.totalorder %s15, 0
      %p56 = por %p54, %p55
      %p57 = scmp.ne.s32.totalorder %s49, %s51
      %p58 = scmp.eq.s32.totalorder %s20, 1
      %p59 = por %p57, %p58
      %p60 = scmp.ne.s32.totalorder %s51, %s52
      %p61 = scmp.eq.s32.totalorder %s20, 0
      %p62 = por %p60, %p61
      %p63 = scmp.ne.s32.totalorder %s51, %s52
      %p64 = scmp.eq.s32.totalorder %s21, 1
      %p65 = por %p63, %p64
      %p67 = scmp.ne.s32.totalorder %s52, %s66
      %p68 = scmp.eq.s32.totalorder %s21, 0
      %p69 = por %p67, %p68
      %s71 = sadd.s32 %s70, 1
      %p74 = scmp.eq.s32.totalorder %s15, 1
      %p75 = scmp.ne.s32.totalorder %s70, %s72
      %p76 = scmp.eq.s32.totalorder %s15, 0
      %p77 = por %p75, %p76
      %p78 = scmp.ne.s32.totalorder %s70, %s72
      %p79 = scmp.eq.s32.totalorder %s20, 1
      %p80 = por %p78, %p79
      %p81 = scmp.ne.s32.totalorder %s72, %s73
      %p82 = scmp.eq.s32.totalorder %s20, 0
      %p83 = por %p81, %p82
      %p84 = scmp.ne.s32.totalorder %s72, %s73
      %p85 = scmp.eq.s32.totalorder %s21, 1
      %p86 = por %p84, %p85
      %p88 = scmp.ne.s32.totalorder %s73, %s87
      %p89 = scmp.eq.s32.totalorder %s21, 0
      %p90 = por %p88, %p89
      %s92 = sadd.s32 %s91, 1
      %p95 = scmp.eq.s32.totalorder %s15, 1
      %p96 = scmp.ne.s32.totalorder %s91, %s93
      %p97 = scmp.eq.s32.totalorder %s15, 0
      %p98 = por %p96, %p97
      %p99 = scmp.ne.s32.totalorder %s91, %s93
      %p100 = scmp.eq.s32.totalorder %s20, 1
      %p101 = por %p99, %p100
      %p102 = scmp.ne.s32.totalorder %s93, %s94
      %p103 = scmp.eq.s32.totalorder %s20, 0
      %p104 = por %p102, %p103
      %p105 = scmp.ne.s32.totalorder %s93, %s94
      %p106 = scmp.eq.s32.totalorder %s21, 1
      %p107 = por %p105, %p106
      %p109 = scmp.ne.s32.totalorder %s94, %s108
      %p110 = scmp.eq.s32.totalorder %s21, 0
      %p111 = por %p109, %p110
      %s113 = sadd.s32 %s112, 1
      %p116 = scmp.eq.s32.totalorder %s15, 1
      %p117 = scmp.ne.s32.totalorder %s112, %s114
      %p118 = scmp.eq.s32.totalorder %s15, 0
      %p119 = por %p117, %p118
      %p120 = scmp.ne.s32.totalorder %s112, %s114
      %p121 = scmp.eq.s32.totalorder %s20, 1
      %p122 = por %p120, %p121
      %p123 = scmp.ne.s32.totalorder %s114, %s115
      %p124 = scmp.eq.s32.totalorder %s20, 0
      %p125 = por %p123, %p124
      %p126 = scmp.ne.s32.totalorder %s114, %s115
      %p127 = scmp.eq.s32.totalorder %s21, 1
      %p128 = por %p126, %p127
      %p130 = scmp.ne.s32.totalorder %s115, %s129
      %p131 = scmp.eq.s32.totalorder %s21, 0
      %p132 = por %p130, %p131
      %s133 = ssub.s32 %s15, %s22
      %p134 = scmp.eq.s32.totalorder %s133, 0
      %s136 = sadd.s32 %s135, 1
      %s137 = scalar_select %p134, %s135, %s136
      %p140 = pneg %p134
      %p141 = scmp.eq.s32.totalorder %s15, 1
      %p142 = por %p140, %p141
      %p143 = scmp.ne.s32.totalorder %s135, %s138
      %p144 = scmp.eq.s32.totalorder %s15, 0
      %p145 = por %p143, %p144
      %p146 = scmp.ne.s32.totalorder %s135, %s138
      %p147 = scmp.eq.s32.totalorder %s20, 1
      %p148 = por %p146, %p147
      %p149 = scmp.ne.s32.totalorder %s138, %s139
      %p150 = scmp.eq.s32.totalorder %s20, 0
      %p151 = por %p149, %p150
      %p152 = scmp.ne.s32.totalorder %s138, %s139
      %p153 = scmp.eq.s32.totalorder %s21, 1
      %p154 = por %p152, %p153
      %p156 = scmp.ne.s32.totalorder %s139, %s155
      %p157 = scmp.eq.s32.totalorder %s21, 0
      %p158 = por %p156, %p157
      %p159 = scmp.le.s32.totalorder 1, %s15
      %p160 = scmp.lt.s32.totalorder %s15, 3
      %p161 = pnand %p159, %p160
      %p162 = pneg %p161
      // Predicated region
      $region9: #{tpu_custom_call.1} parent=5 // pred_check
        _
      $region10: #{tpu_custom_call.1} parent=5 // pred_check_branch
        %164 = sbr.rel (%p161) target = $region12
      $region11: #{tpu_custom_call.1} parent=5 // pred_region
        %s165 = ssub.s32 %s15, 1
        // Predicated region
        $region13: #{tpu_custom_call.1} parent=11 // pred_check
          %p166 = pneg %p62
        $region14: #{tpu_custom_call.1} parent=11 // pred_check_branch
          %168 = sbr.rel (%p166) target = $region16
        $region15: #{tpu_custom_call.1} parent=11 // pred_region
          _
        $region16: #{tpu_custom_call.1} parent=11 // pred_fallthru
          _
        // Predicated region
        $region17: #{tpu_custom_call.1} parent=11 // pred_check
          %p169 = pneg %p83
        $region18: #{tpu_custom_call.1} parent=11 // pred_check_branch
          %171 = sbr.rel (%p169) target = $region20
        $region19: #{tpu_custom_call.1} parent=11 // pred_region
          %173 = vsyncadd [#allocation5], 0
          %s174 = sshll.u32 %s2, 4
          %s175 = int_to_ptr.hbm [resolvable:$true] %s174
          %s176 = sshll.u32 [#allocation4], 4
          %s177 = int_to_ptr.vmem [resolvable:$true] %s176
          %182 = dma.hbm_to_vmem [thread:$0]  %s175, 512, %s177, [#allocation5], 128, 128, 8
        $region20: #{tpu_custom_call.1} parent=11 // pred_fallthru
          _
        // Predicated region
        $region21: #{tpu_custom_call.1} parent=11 // pred_check
          %p183 = pneg %p104
        $region22: #{tpu_custom_call.1} parent=11 // pred_check_branch
          %185 = sbr.rel (%p183) target = $region24
        $region23: #{tpu_custom_call.1} parent=11 // pred_region
          _
        $region24: #{tpu_custom_call.1} parent=11 // pred_fallthru
          _
        // Predicated region
        $region25: #{tpu_custom_call.1} parent=11 // pred_check
          %p186 = pneg %p125
        $region26: #{tpu_custom_call.1} parent=11 // pred_check_branch
          %188 = sbr.rel (%p186) target = $region28
        $region27: #{tpu_custom_call.1} parent=11 // pred_region
          _
        $region28: #{tpu_custom_call.1} parent=11 // pred_fallthru
          _
      $region12: #{tpu_custom_call.1} parent=5 // pred_fallthru
        _
      %p189 = scmp.lt.s32.totalorder %s15, 2
      // Predicated region
      $region29: #{tpu_custom_call.1} parent=5 // pred_check
        %p190 = pneg %p189
      $region30: #{tpu_custom_call.1} parent=5 // pred_check_branch
        %192 = sbr.rel (%p190) target = $region32
      $region31: #{tpu_custom_call.1} parent=5 // pred_region
        // Predicated region
        $region33: #{tpu_custom_call.1} parent=31 // pred_check
          %p193 = pneg %p35
        $region34: #{tpu_custom_call.1} parent=31 // pred_check_branch
          %195 = sbr.rel (%p193) target = $region36
        $region35: #{tpu_custom_call.1} parent=31 // pred_region
          %s196 = sand.u32 %s25, 1
          %s197 = scalar_lea.sflag [#allocation3], %s196
          %s198 = sand.u32 %s25, 1
          %s199 = smul.addr %s198, 32
          %s200 = scalar_lea.vmem [#allocation2], %s199
          %202 = vsyncadd %s197, 0
          %s203 = smul.addr %s15, 4
          %s204 = smul.addr %s203, 8
          %s205 = scalar_lea.hbm %s0, %s204
          %s206 = sshll.u32 %s205, 4
          %s207 = int_to_ptr.hbm [resolvable:$true] %s206
          %s208 = sshll.u32 %s200, 4
          %s209 = int_to_ptr.vmem [resolvable:$true] %s208
          %214 = dma.hbm_to_vmem [thread:$0]  %s207, 512, %s209, %s197, 128, 128, 8
        $region36: #{tpu_custom_call.1} parent=31 // pred_fallthru
          _
      $region32: #{tpu_custom_call.1} parent=5 // pred_fallthru
        _
      %p215 = scmp.le.s32.totalorder 1, %s15
      %p216 = scmp.lt.s32.totalorder %s15, 3
      %p217 = pnand %p215, %p216
      %p218 = pneg %p217
      // Predicated region
      $region37: #{tpu_custom_call.1} parent=5 // pred_check
        _
      $region38: #{tpu_custom_call.1} parent=5 // pred_check_branch
        %220 = sbr.rel (%p217) target = $region40
      $region39: #{tpu_custom_call.1} parent=5 // pred_region
        %s221 = ssub.s32 %s15, 1
        %s222 = sand.u32 %s28, 1
        %s223 = scalar_lea.sflag [#allocation3], %s222
        %s224 = sand.u32 %s28, 1
        %s225 = smul.addr %s224, 32
        %s226 = scalar_lea.vmem [#allocation2], %s225
        // Predicated region
        $region41: #{tpu_custom_call.1} parent=39 // pred_check
          %p227 = pneg %p41
        $region42: #{tpu_custom_call.1} parent=39 // pred_check_branch
          %229 = sbr.rel (%p227) target = $region44
        $region43: #{tpu_custom_call.1} parent=39 // pred_region
          %231 = dma.done %s223, 512
        $region44: #{tpu_custom_call.1} parent=39 // pred_fallthru
          _
        // Predicated region
        $region45: #{tpu_custom_call.1} parent=39 // pred_check
          %p232 = pneg %p83
        $region46: #{tpu_custom_call.1} parent=39 // pred_check_branch
          %234 = sbr.rel (%p232) target = $region48
        $region47: #{tpu_custom_call.1} parent=39 // pred_region
          %236 = dma.done [#allocation5], 512
        $region48: #{tpu_custom_call.1} parent=39 // pred_fallthru
          _
        %s237 = sand.u32 %s28, 1
        %s238 = scalar_lea.sflag [#allocation3], %s237
        %s239 = sand.u32 %s28, 1
        %s240 = smul.addr %s239, 32
        %s241 = scalar_lea.vmem [#allocation2], %s240
        %p242 = pneg %p41
        %p243 = pneg %p38
        %p244 = pneg %p62
        %p245 = pneg %p59
        %p246 = pneg %p83
        %p247 = pneg %p80
        %p248 = pneg %p104
        %p249 = pneg %p101
        %p250 = pneg %p125
        %p251 = pneg %p122
        %p252 = pneg %p151
        %p253 = pneg %p148
        %p254 = scmp.lt.s32.totalorder %s20, 1
        %s255 = scalar_select %p254, %s20, 1
        %s256 = smul.addr %s255, 4
        %s257 = scalar_lea.vmem %s5, %s256
        %p258 = scmp.lt.s32.totalorder %s20, 1
        %s259 = scalar_select %p258, %s20, 1
        %s260 = smul.addr %s259, 4
        %s261 = scalar_lea.vmem %s5, %s260
        %v262 = vld [vmem:[%s226] sm:$0xff]
        %v263 = vld [vmem:[%s226 + $0x8] sm:$0xff]
        %v264 = vld [vmem:[%s226 + $0x10] sm:$0xff]
        %v265 = vld [vmem:[%s226 + $0x18] sm:$0xff]
        %v266 = vlaneseq
        %v267 = vand.u32 %v266, 127
        %vm268 = vcmp.eq.s32.totalorder %v267, 0
        %vm269 = vcmp.eq.s32.totalorder %v267, 127
        %v270 = vld [vmem:[%s3] sm:$0xff]
        %v271 = vld [vmem:[%s3 + $0x8] sm:$0xff]
        %v272 = vld [vmem:[%s3 + $0x10] sm:$0xff]
        %v273 = vld [vmem:[%s3 + $0x18] sm:$0xff]
        %v274 = vld [vmem:[%s1] sm:$0xff]
        %v275 = vld [vmem:[%s1 + $0x8] sm:$0xff]
        %v276 = vld [vmem:[%s1 + $0x10] sm:$0xff]
        %v277 = vld [vmem:[%s1 + $0x18] sm:$0xff]
        %278 = vrot.lane.b32.xlu0 %v262, 1
        %v279 = vpop.permute.xlu0 %278
        %280 = vrot.lane.b32.xlu0 %v263, 1
        %v281 = vpop.permute.xlu0 %280
        %282 = vrot.lane.b32.xlu0 %v264, 1
        %v283 = vpop.permute.xlu0 %282
        %284 = vrot.lane.b32.xlu0 %v265, 1
        %v285 = vpop.permute.xlu0 %284
        %v286 = vsel %vm268, 1, 0
        %vm287 = vcmp.eq.s32.totalorder %v286, 1
        %v288 = vsel %vm287, 0.0, %v279
        %v289 = vsel %vm287, 0.0, %v281
        %v290 = vsel %vm287, 0.0, %v283
        %v291 = vsel %vm287, 0.0, %v285
        %292 = vrot.lane.b32.xlu0 %v262, 127
        %v293 = vpop.permute.xlu0 %292
        %294 = vrot.lane.b32.xlu0 %v263, 127
        %v295 = vpop.permute.xlu0 %294
        %296 = vrot.lane.b32.xlu0 %v264, 127
        %v297 = vpop.permute.xlu0 %296
        %298 = vrot.lane.b32.xlu0 %v265, 127
        %v299 = vpop.permute.xlu0 %298
        %v300 = vsel %vm269, 1, 0
        %vm301 = vcmp.eq.s32.totalorder %v300, 1
        %v302 = vsel %vm301, 0.0, %v293
        %v303 = vsel %vm301, 0.0, %v295
        %v304 = vsel %vm301, 0.0, %v297
        %v305 = vsel %vm301, 0.0, %v299
        %307 = vset.pattern.permute.xlu0 0
        %308 = vperm.xlu0 %307, %v270
        %v309 = vpop.permute.xlu0 %308
        %312 = vset.pattern.permute.xlu0 0
        %313 = vperm.xlu0 %312, %v271
        %v314 = vpop.permute.xlu0 %313
        %317 = vset.pattern.permute.xlu0 0
        %318 = vperm.xlu0 %317, %v272
        %v319 = vpop.permute.xlu0 %318
        %322 = vset.pattern.permute.xlu0 0
        %323 = vperm.xlu0 %322, %v273
        %v324 = vpop.permute.xlu0 %323
        %vm326 = vcmask 785408
        %v328 = vsel %vm326, %v274, 0
        %v331 = vsel %vm326, %v275, 0
        %v334 = vsel %vm326, %v276, 0
        %v337 = vsel %vm326, %v277, 0
        %339 = vmatpush.msra.mxu0 0.0
        %340 = vmatpush.msra.mxu0 0.0
        %341 = vmatpush.msra.mxu0 0.0
        %342 = vmatpush.msra.mxu0 0.0
        %343 = vmatpush.msra.mxu0 %v305
        %344 = vmatpush.msra.mxu0 %v304
        %345 = vmatpush.msra.mxu0 %v303
        %346 = vmatpush.msra.mxu0 %v302
        %347 = vmatpush.msra.mxu0 %v265
        %348 = vmatpush.msra.mxu0 %v264
        %349 = vmatpush.msra.mxu0 %v263
        %350 = vmatpush.msra.mxu0 %v262
        %351 = vmatpush.msra.mxu0 %v291
        %352 = vmatpush.msra.mxu0 %v290
        %353 = vmatpush.msra.mxu0 %v289
        %354 = vmatpush.msra.mxu0 %v288
        %355 = vmatmul.f32.gmra.mxu0 %v328
        %v356 = vpop.f32.mrf.mxu0
        %v357 = vadd.f32 %v309, %v356
        %358 = vmatmul.f32.gmra.mxu0 %v331
        %v359 = vpop.f32.mrf.mxu0
        %v360 = vadd.f32 %v314, %v359
        %361 = vmatmul.f32.gmra.mxu0 %v334
        %v362 = vpop.f32.mrf.mxu0
        %v363 = vadd.f32 %v319, %v362
        %364 = vmatmul.f32.gmra.mxu0 %v337
        %v365 = vpop.f32.mrf.mxu0
        %v366 = vadd.f32 %v324, %v365
        %367 = vdwg.mxu0
        %v368 = vmax.f32 %v357, 0.0
        %v369 = vmax.f32 %v360, 0.0
        %v370 = vmax.f32 %v363, 0.0
        %v371 = vmax.f32 %v366, 0.0
        %v372 = vadd.f32 %v368, %v369
        %v373 = vadd.f32 %v372, %v370
        %v374 = vadd.f32 %v373, %v371
        %v375 = vrot.slane %v374, 4
        %v376 = vadd.f32 %v374, %v375
        %v377 = vrot.slane %v376, 2
        %v378 = vadd.f32 %v376, %v377
        %v379 = vrot.slane %v378, 1
        %v380 = vadd.f32 %v378, %v379
        %v381 = vrcp.pop 32.0
        %v382 = vmul.f32 32.0, %v381
        %v383 = vsub.f32 1.0, %v382
        %v384 = vmul.f32 %v381, %v383
        %v385 = vadd.f32 %v381, %v384
        %vm386 = vweird.f32 %v381
        %v387 = vsel %vm386, %v381, %v385
        %v388 = vmul.f32 %v380, %v387
        %v389 = vmul.f32 %v368, %v368
        %v390 = vmul.f32 %v369, %v369
        %v391 = vmul.f32 %v370, %v370
        %v392 = vmul.f32 %v371, %v371
        %v393 = vadd.f32 %v389, %v390
        %v394 = vadd.f32 %v393, %v391
        %v395 = vadd.f32 %v394, %v392
        %v396 = vrot.slane %v395, 4
        %v397 = vadd.f32 %v395, %v396
        %v398 = vrot.slane %v397, 2
        %v399 = vadd.f32 %v397, %v398
        %v400 = vrot.slane %v399, 1
        %v401 = vadd.f32 %v399, %v400
        %v402 = vmul.f32 %v401, %v387
        %v403 = vmul.f32 %v388, %v388
        %v404 = vsub.f32 %v402, %v403
        %v405 = vsub.f32 %v368, %v388
        %v406 = vsub.f32 %v369, %v388
        %v407 = vsub.f32 %v370, %v388
        %v408 = vsub.f32 %v371, %v388
        %v409 = vadd.f32 %v404, 1e-05
        %v410 = vrsqrt.pop %v409
        %v411 = vmul.f32 %v410, %v409
        %v412 = vmul.f32 %v411, %v410
        %v413 = vmul.f32 0.5, %v412
        %v414 = vsub.f32 1.5, %v413
        %v415 = vmul.f32 %v410, %v414
        %vm416 = vweird.f32 %v409
        %vm417 = vweird.f32 %v410
        %vm418 = vmor %vm416, %vm417
        %v419 = vsel %vm418, %v410, %v415
        %v420 = vmul.f32 %v405, %v419
        %v421 = vmul.f32 %v406, %v419
        %v422 = vmul.f32 %v407, %v419
        %v423 = vmul.f32 %v408, %v419
        %424 = vset.pattern.permute.xlu0 1
        %425 = vperm.xlu0 %424, %v270
        %v426 = vpop.permute.xlu0 %425
        %428 = vset.pattern.permute.xlu0 1
        %429 = vperm.xlu0 %428, %v271
        %v430 = vpop.permute.xlu0 %429
        %432 = vset.pattern.permute.xlu0 1
        %433 = vperm.xlu0 %432, %v272
        %v434 = vpop.permute.xlu0 %433
        %436 = vset.pattern.permute.xlu0 1
        %437 = vperm.xlu0 %436, %v273
        %v438 = vpop.permute.xlu0 %437
        %v440 = vmul.f32 %v420, %v426
        %v441 = vmul.f32 %v421, %v430
        %v442 = vmul.f32 %v422, %v434
        %v443 = vmul.f32 %v423, %v438
        %444 = vset.pattern.permute.xlu0 2
        %445 = vperm.xlu0 %444, %v270
        %v446 = vpop.permute.xlu0 %445
        %448 = vset.pattern.permute.xlu0 2
        %449 = vperm.xlu0 %448, %v271
        %v450 = vpop.permute.xlu0 %449
        %452 = vset.pattern.permute.xlu0 2
        %453 = vperm.xlu0 %452, %v272
        %v454 = vpop.permute.xlu0 %453
        %456 = vset.pattern.permute.xlu0 2
        %457 = vperm.xlu0 %456, %v273
        %v458 = vpop.permute.xlu0 %457
        %v460 = vadd.f32 %v440, %v446
        %v461 = vadd.f32 %v441, %v450
        %v462 = vadd.f32 %v442, %v454
        %v463 = vadd.f32 %v443, %v458
        %v464 = vld [vmem:[#allocation4] sm:$0xff]
        %v465 = vld [vmem:[#allocation4 + $0x8] sm:$0xff]
        %v466 = vld [vmem:[#allocation4 + $0x10] sm:$0xff]
        %v467 = vld [vmem:[#allocation4 + $0x18] sm:$0xff]
        %468 = vrot.lane.b32.xlu0 %v460, 1
        %v469 = vpop.permute.xlu0 %468
        %470 = vrot.lane.b32.xlu0 %v461, 1
        %v471 = vpop.permute.xlu0 %470
        %472 = vrot.lane.b32.xlu0 %v462, 1
        %v473 = vpop.permute.xlu0 %472
        %474 = vrot.lane.b32.xlu0 %v463, 1
        %v475 = vpop.permute.xlu0 %474
        %v476 = vsel %vm287, 0.0, %v469
        %v477 = vsel %vm287, 0.0, %v471
        %v478 = vsel %vm287, 0.0, %v473
        %v479 = vsel %vm287, 0.0, %v475
        %480 = vrot.lane.b32.xlu0 %v460, 127
        %v481 = vpop.permute.xlu0 %480
        %482 = vrot.lane.b32.xlu0 %v461, 127
        %v483 = vpop.permute.xlu0 %482
        %484 = vrot.lane.b32.xlu0 %v462, 127
        %v485 = vpop.permute.xlu0 %484
        %486 = vrot.lane.b32.xlu0 %v463, 127
        %v487 = vpop.permute.xlu0 %486
        %v488 = vsel %vm301, 0.0, %v481
        %v489 = vsel %vm301, 0.0, %v483
        %v490 = vsel %vm301, 0.0, %v485
        %v491 = vsel %vm301, 0.0, %v487
        %492 = vset.pattern.permute.xlu0 3
        %493 = vperm.xlu0 %492, %v270
        %v494 = vpop.permute.xlu0 %493
        %496 = vset.pattern.permute.xlu0 3
        %497 = vperm.xlu0 %496, %v271
        %v498 = vpop.permute.xlu0 %497
        %500 = vset.pattern.permute.xlu0 3
        %501 = vperm.xlu0 %500, %v272
        %v502 = vpop.permute.xlu0 %501
        %504 = vset.pattern.permute.xlu0 3
        %505 = vperm.xlu0 %504, %v273
        %v506 = vpop.permute.xlu0 %505
        %v509 = vsel %vm326, %v464, 0
        %v512 = vsel %vm326, %v465, 0
        %v515 = vsel %vm326, %v466, 0
        %v518 = vsel %vm326, %v467, 0
        %520 = vmatpush.msra.mxu0 0.0
        %521 = vmatpush.msra.mxu0 0.0
        %522 = vmatpush.msra.mxu0 0.0
        %523 = vmatpush.msra.mxu0 0.0
        %524 = vmatpush.msra.mxu0 %v491
        %525 = vmatpush.msra.mxu0 %v490
        %526 = vmatpush.msra.mxu0 %v489
        %527 = vmatpush.msra.mxu0 %v488
        %528 = vmatpush.msra.mxu0 %v463
        %529 = vmatpush.msra.mxu0 %v462
        %530 = vmatpush.msra.mxu0 %v461
        %531 = vmatpush.msra.mxu0 %v460
        %532 = vmatpush.msra.mxu0 %v479
        %533 = vmatpush.msra.mxu0 %v478
        %534 = vmatpush.msra.mxu0 %v477
        %535 = vmatpush.msra.mxu0 %v476
        %536 = vmatmul.f32.gmra.mxu0 %v509
        %v537 = vpop.f32.mrf.mxu0
        %v538 = vadd.f32 %v494, %v537
        %539 = vmatmul.f32.gmra.mxu0 %v512
        %v540 = vpop.f32.mrf.mxu0
        %v541 = vadd.f32 %v498, %v540
        %542 = vmatmul.f32.gmra.mxu0 %v515
        %v543 = vpop.f32.mrf.mxu0
        %v544 = vadd.f32 %v502, %v543
        %545 = vmatmul.f32.gmra.mxu0 %v518
        %v546 = vpop.f32.mrf.mxu0
        %v547 = vadd.f32 %v506, %v546
        %548 = vdwg.mxu0
        %v549 = vmax.f32 %v538, 0.0
        %v550 = vmax.f32 %v541, 0.0
        %v551 = vmax.f32 %v544, 0.0
        %v552 = vmax.f32 %v547, 0.0
        %v553 = vadd.f32 %v549, %v550
        %v554 = vadd.f32 %v553, %v551
        %v555 = vadd.f32 %v554, %v552
        %v556 = vrot.slane %v555, 4
        %v557 = vadd.f32 %v555, %v556
        %v558 = vrot.slane %v557, 2
        %v559 = vadd.f32 %v557, %v558
        %v560 = vrot.slane %v559, 1
        %v561 = vadd.f32 %v559, %v560
        %v562 = vmul.f32 %v561, %v387
        %v563 = vmul.f32 %v549, %v549
        %v564 = vmul.f32 %v550, %v550
        %v565 = vmul.f32 %v551, %v551
        %v566 = vmul.f32 %v552, %v552
        %v567 = vadd.f32 %v563, %v564
        %v568 = vadd.f32 %v567, %v565
        %v569 = vadd.f32 %v568, %v566
        %v570 = vrot.slane %v569, 4
        %v571 = vadd.f32 %v569, %v570
        %v572 = vrot.slane %v571, 2
        %v573 = vadd.f32 %v571, %v572
        %v574 = vrot.slane %v573, 1
        %v575 = vadd.f32 %v573, %v574
        %v576 = vmul.f32 %v575, %v387
        %v577 = vmul.f32 %v562, %v562
        %v578 = vsub.f32 %v576, %v577
        %v579 = vsub.f32 %v549, %v562
        %v580 = vsub.f32 %v550, %v562
        %v581 = vsub.f32 %v551, %v562
        %v582 = vsub.f32 %v552, %v562
        %v583 = vadd.f32 %v578, 1e-05
        %v584 = vrsqrt.pop %v583
        %v585 = vmul.f32 %v584, %v583
        %v586 = vmul.f32 %v585, %v584
        %v587 = vmul.f32 0.5, %v586
        %v588 = vsub.f32 1.5, %v587
        %v589 = vmul.f32 %v584, %v588
        %vm590 = vweird.f32 %v583
        %vm591 = vweird.f32 %v584
        %vm592 = vmor %vm590, %vm591
        %v593 = vsel %vm592, %v584, %v589
        %v594 = vmul.f32 %v579, %v593
        %v595 = vmul.f32 %v580, %v593
        %v596 = vmul.f32 %v581, %v593
        %v597 = vmul.f32 %v582, %v593
        %598 = vset.pattern.permute.xlu0 4
        %599 = vperm.xlu0 %598, %v270
        %v600 = vpop.permute.xlu0 %599
        %602 = vset.pattern.permute.xlu0 4
        %603 = vperm.xlu0 %602, %v271
        %v604 = vpop.permute.xlu0 %603
        %606 = vset.pattern.permute.xlu0 4
        %607 = vperm.xlu0 %606, %v272
        %v608 = vpop.permute.xlu0 %607
        %610 = vset.pattern.permute.xlu0 4
        %611 = vperm.xlu0 %610, %v273
        %v612 = vpop.permute.xlu0 %611
        %v614 = vmul.f32 %v594, %v600
        %v615 = vmul.f32 %v595, %v604
        %v616 = vmul.f32 %v596, %v608
        %v617 = vmul.f32 %v597, %v612
        %618 = vset.pattern.permute.xlu0 5
        %619 = vperm.xlu0 %618, %v270
        %v620 = vpop.permute.xlu0 %619
        %622 = vset.pattern.permute.xlu0 5
        %623 = vperm.xlu0 %622, %v271
        %v624 = vpop.permute.xlu0 %623
        %626 = vset.pattern.permute.xlu0 5
        %627 = vperm.xlu0 %626, %v272
        %v628 = vpop.permute.xlu0 %627
        %630 = vset.pattern.permute.xlu0 5
        %631 = vperm.xlu0 %630, %v273
        %v632 = vpop.permute.xlu0 %631
        %v634 = vadd.f32 %v614, %v620
        %v635 = vadd.f32 %v615, %v624
        %v636 = vadd.f32 %v616, %v628
        %v637 = vadd.f32 %v617, %v632
        %v638 = vld [vmem:[%s4] sm:$0x7]
        %639 = vset.pattern.permute.xlu0 6
        %640 = vperm.xlu0 %639, %v270
        %v641 = vpop.permute.xlu0 %640
        %vm643 = vcmask 261120
        %v645 = vsel %vm643, %v638, 0
        %647 = vmatpush.msra.mxu0 0.0
        %648 = vmatpush.msra.mxu0 0.0
        %649 = vmatpush.msra.mxu0 0.0
        %650 = vmatpush.msra.mxu0 0.0
        %651 = vmatpush.msra.mxu0 0.0
        %652 = vmatpush.msra.mxu0 0.0
        %653 = vmatpush.msra.mxu0 0.0
        %654 = vmatpush.msra.mxu0 0.0
        %655 = vmatpush.msra.mxu0 0.0
        %656 = vmatpush.msra.mxu0 0.0
        %657 = vmatpush.msra.mxu0 0.0
        %658 = vmatpush.msra.mxu0 0.0
        %659 = vmatpush.msra.mxu0 %v637
        %660 = vmatpush.msra.mxu0 %v636
        %661 = vmatpush.msra.mxu0 %v635
        %662 = vmatpush.msra.mxu0 %v634
        %663 = vmatmul.f32.gmra.mxu0 %v645
        %v664 = vpop.f32.mrf.mxu0
        %v665 = vadd.f32 %v641, %v664
        %666 = vdwg.mxu0
        %667 = vst [vmem:[%s261] sm:$0x7] %v665
        %p668 = scmp.lt.s32.totalorder %s20, 1
        %s669 = scalar_select %p668, %s20, 1
        %s670 = smul.addr %s669, 4
        %s671 = scalar_lea.vmem %s5, %s670
        // Predicated region
        $region49: #{tpu_custom_call.1} parent=39 // pred_check
          %p672 = pneg %p148
        $region50: #{tpu_custom_call.1} parent=39 // pred_check_branch
          %674 = sbr.rel (%p672) target = $region52
        $region51: #{tpu_custom_call.1} parent=39 // pred_region
          _
        $region52: #{tpu_custom_call.1} parent=39 // pred_fallthru
          _
      $region40: #{tpu_custom_call.1} parent=5 // pred_fallthru
        _
      %p675 = scmp.le.s32.totalorder 2, %s15
      // Predicated region
      $region53: #{tpu_custom_call.1} parent=5 // pred_check
        %p676 = pneg %p675
      $region54: #{tpu_custom_call.1} parent=5 // pred_check_branch
        %678 = sbr.rel (%p676) target = $region56
      $region55: #{tpu_custom_call.1} parent=5 // pred_region
        %s679 = ssub.s32 %s15, 2
        // Predicated region
        $region57: #{tpu_custom_call.1} parent=55 // pred_check
          %p680 = pneg %p154
        $region58: #{tpu_custom_call.1} parent=55 // pred_check_branch
          %682 = sbr.rel (%p680) target = $region60
        $region59: #{tpu_custom_call.1} parent=55 // pred_region
          %p683 = scmp.lt.s32.totalorder %s21, 1
          %s684 = scalar_select %p683, %s21, 1
          %s685 = smul.addr %s684, 4
          %s686 = scalar_lea.vmem %s5, %s685
        $region60: #{tpu_custom_call.1} parent=55 // pred_fallthru
          _
      $region56: #{tpu_custom_call.1} parent=5 // pred_fallthru
        _
    $region6: #{tpu_custom_call.1} parent=1 // loop_footer
      %s19 = sadd.s32 1, %s15
    $region7: #{tpu_custom_call.1} parent=1 // loop_footer_branch
      %14 = sbr.rel target = $region3
    $region8: #{tpu_custom_call.1} parent=1 // loop_exit
      _
    %687 = vsyncpa [#allocation3], 1
    %s688 = scalar_lea.sflag [#allocation3], 1
    %689 = vsyncpa %s688, 1
    %690 = vsyncpa [#allocation5], 1

</llo_original>
